<compile_context>
chip_gen: v7x
topology: tpu7x:2x2x1
jax: 0.10.0
libtpu: 0.0.40
codegen_flags: <defaults>
</compile_context>

<pallas_src>
import math

import jax
import jax.numpy as jnp
from jax.experimental import pallas as pl
from jax.experimental.pallas import tpu as pltpu


def amnpe_partial_kernel(theta_ref, b_ref, x_ref, valid_ref, bnd_ref,
                         wx_ref, wb_ref, bias_ref,
                         part_ref):
    """One batch tile (batch on lanes) -> lane-dense (D,128) partial-sum slab."""
    theta = theta_ref[...]                        # (D, T) f32   (theta^T tile)
    b_i = b_ref[...]                              # (D, T) int8  {0,1}
    x = x_ref[...]                                # (L, T) f32   (x^T tile)
    valid = valid_ref[...]                        # (1, T) f32   1 = real row, 0 = pad

    d, t = theta.shape

    # theta' = roll(theta, 1, batch axis): in-tile lane rotation (XLU) + halo fix of
    # the wrap lane 0 with theta[(tile_start - 1) % N] shipped via bnd_ref.
    theta_p = pltpu.roll(theta, shift=1, axis=1)  # (D, T)
    bnd_col = bnd_ref[...][0, :, 0:1]             # (D, 1)
    lane = jax.lax.broadcasted_iota(jnp.int32, (d, t), 1)
    theta_p = jnp.where(lane == 0, bnd_col, theta_p)

    # theta_b = b ? theta : theta'   (integer mask compare, no float compare)
    theta_m = jnp.where(b_i != 0, theta, theta_p)
    b_signed = 2.0 * b_i.astype(jnp.float32) - 1.0

    # Fused conditioning (transposed): ms^T = Wx^T @ x^T + Wb^T @ (2b-1)^T + bias
    ms = (jnp.dot(wx_ref[...], x, preferred_element_type=jnp.float32)
          + jnp.dot(wb_ref[...], b_signed, preferred_element_type=jnp.float32)
          + bias_ref[...])                        # (2D, T)
    mu = ms[:d, :]                                # (D, T)
    log_sigma = ms[d:, :]                         # (D, T)

    z = (theta_m - mu) * jnp.exp(-log_sigma)
    # -0.5*log(2*pi) constant folded into the host-side epilogue.
    terms = (-0.5 * (z * z) - log_sigma) * valid  # (D, T); padded lanes -> 0

    # Lane-parallel partial: fold T lanes into a single 128-lane slab with VPU adds
    # (128-aligned static slices, no cross-lane reduction in the kernel).
    slab = terms[:, 0:128]
    for c in range(1, t // 128):
        slab = slab + terms[:, c * 128:(c + 1) * 128]
    part_ref[0] = slab                            # (D, 128) lane+sublane dense store


def amnpe_loss(theta, x, b, params, *, tile_n=8192):
    """theta: (N, D) f32, x: (N, L) f32, b: (N, D) bool, params: dict of weights."""
    N, D = theta.shape
    L = x.shape[-1]

    # Tile size: multiple of 128 lanes; clamp so a double-buffered tile stays well
    # under the scoped-VMEM defaults (v5e 16 MiB, v6e 32 MiB, v7x 32 MiB / 64 MiB TC).
    tile_n = max(128, (int(tile_n) // 128) * 128)
    tile_n = min(tile_n, 32768)
    tile_n = min(tile_n, ((N + 127) // 128) * 128)
    num_tiles = -(-N // tile_n)                   # cdiv
    N_pad = num_tiles * tile_n
    pad = N_pad - N

    # Transposed (batch-on-lanes) operands.  In a real pipeline these would be the
    # native layouts; here the transposes are wrapper glue outside the kernel.
    b_i8 = b.astype(jnp.int8)
    theta_T = jnp.pad(theta, ((0, pad), (0, 0))).T          # (D, N_pad) f32
    x_T = jnp.pad(x, ((0, pad), (0, 0))).T                  # (L, N_pad) f32
    b_T = jnp.pad(b_i8, ((0, pad), (0, 0))).T               # (D, N_pad) int8
    valid = (jnp.arange(N_pad) < N).astype(jnp.float32)[None, :]   # (1, N_pad)

    # Halo column per tile: theta[(tile_start - 1) % N] (wrap row of roll(theta,1)).
    bnd_vals = theta[(jnp.arange(num_tiles) * tile_n - 1) % N]      # (num_tiles, D)
    bnd_slab = jnp.broadcast_to(bnd_vals[:, :, None], (num_tiles, D, 128))

    # Stack + transpose weights so the kernel does 2 small MXU dots instead of 4.
    wx_T = jnp.concatenate([params["wmx"].T, params["wsx"].T], axis=0)   # (2D, L)
    wb_T = jnp.concatenate([params["wmb"].T, params["wsb"].T], axis=0)   # (2D, D)
    bias_T = jnp.concatenate([params["bm"], params["bs"]], axis=-1).T    # (2D, 1)

    partials = pl.pallas_call(
        amnpe_partial_kernel,
        out_shape=jax.ShapeDtypeStruct((num_tiles, D, 128), jnp.float32),
        grid=(num_tiles,),
        in_specs=[
            pl.BlockSpec((D, tile_n), lambda i: (0, i)),      # theta^T
            pl.BlockSpec((D, tile_n), lambda i: (0, i)),      # b^T (int8)
            pl.BlockSpec((L, tile_n), lambda i: (0, i)),      # x^T
            pl.BlockSpec((1, tile_n), lambda i: (0, i)),      # validity mask
            pl.BlockSpec((1, D, 128), lambda i: (i, 0, 0)),   # halo column slab
            pl.BlockSpec((2 * D, L), lambda i: (0, 0)),       # [Wmx | Wsx]^T
            pl.BlockSpec((2 * D, D), lambda i: (0, 0)),       # [Wmb | Wsb]^T
            pl.BlockSpec((2 * D, 1), lambda i: (0, 0)),       # [bm  | bs ]^T
        ],
        out_specs=pl.BlockSpec((1, D, 128), lambda i: (i, 0, 0)),
        compiler_params=pltpu.CompilerParams(
            dimension_semantics=("parallel",)),               # v7x: shard tiles across TCs
    )(theta_T, b_T, x_T, valid, bnd_slab, wx_T, wb_T, bias_T)

    # Tiny epilogue: reduce the lane-dense partials, apply -mean and the folded constant.
    total = jnp.sum(partials)
    return -(total / N) + 0.5 * D * math.log(2.0 * math.pi)


def amnpe_loss_reference(theta, x, b, params):
    """Pure-JAX reference mirroring the PyTorch module semantics."""
    theta_prime = jnp.roll(theta, 1, axis=0)
    theta_m = jnp.where(b, theta, theta_prime)
    b_signed = 2.0 * b.astype(jnp.float32) - 1.0
    mu = x @ params["wmx"] + b_signed @ params["wmb"] + params["bm"]
    log_sigma = x @ params["wsx"] + b_signed @ params["wsb"] + params["bs"]
    z = (theta_m - mu) * jnp.exp(-log_sigma)
    log_prob = jnp.sum(-0.5 * z * z - log_sigma - 0.5 * math.log(2.0 * math.pi),
                       axis=-1)
    return -jnp.mean(log_prob)


if __name__ == "__main__":
    # Small demo shapes: 4 grid tiles of 256 rows, last tile padded (1000 -> 1024).
    N, D, L = 1000, 8, 32

    key = jax.random.PRNGKey(0)
    k_theta, k_x, k_b, k1, k2, k3, k4, k5, k6 = jax.random.split(key, 9)

    theta = jax.random.normal(k_theta, (N, D), dtype=jnp.float32)
    x = jax.random.normal(k_x, (N, L), dtype=jnp.float32)
    # mask_dist ~ Bernoulli(0.5), deterministic given the key
    b = jax.random.bernoulli(k_b, 0.5, (N, D))

    scale = 0.1
    params = {
        "wmx": scale * jax.random.normal(k1, (L, D), dtype=jnp.float32),
        "wmb": scale * jax.random.normal(k2, (D, D), dtype=jnp.float32),
        "bm": scale * jax.random.normal(k3, (1, D), dtype=jnp.float32),
        "wsx": scale * jax.random.normal(k4, (L, D), dtype=jnp.float32),
        "wsb": scale * jax.random.normal(k5, (D, D), dtype=jnp.float32),
        "bs": scale * jax.random.normal(k6, (1, D), dtype=jnp.float32),
    }

    loss = amnpe_loss(theta, x, b, params, tile_n=256)
    jax.block_until_ready(loss)

    ref = amnpe_loss_reference(theta, x, b, params)
    assert jnp.allclose(loss, ref, rtol=1e-4, atol=1e-4), (loss, ref)

    print("KERNEL_OK")
</pallas_src>

<mosaic_0001>
module attributes {stable_mosaic.version = 11 : i64} {
  func.func @amnpe_partial_kernel(%arg0: i32, %arg1: memref<8x256xf32, #tpu.memory_space<vmem>>, %arg2: memref<8x256xi8, #tpu.memory_space<vmem>>, %arg3: memref<32x256xf32, #tpu.memory_space<vmem>>, %arg4: memref<1x256xf32, #tpu.memory_space<vmem>>, %arg5: memref<1x8x128xf32, #tpu.memory_space<vmem>>, %arg6: memref<16x32xf32, #tpu.memory_space<vmem>>, %arg7: memref<16x8xf32, #tpu.memory_space<vmem>>, %arg8: memref<16x1xf32, #tpu.memory_space<vmem>>, %arg9: memref<1x8x128xf32, #tpu.memory_space<vmem>>) attributes {dimension_semantics = [#tpu.dimension_semantics<parallel>], iteration_bounds = array<i64: 4>, scalar_prefetch = 0 : i64, scratch_operands = 0 : i64, tpu.core_type = #tpu.core_type<tc>, window_params = [{transform_indices = @transform_0, window_bounds = array<i64: 8, 256>}, {transform_indices = @transform_1, window_bounds = array<i64: 8, 256>}, {transform_indices = @transform_2, window_bounds = array<i64: 32, 256>}, {transform_indices = @transform_3, window_bounds = array<i64: 1, 256>}, {transform_indices = @transform_4, window_bounds = array<i64: 1, 8, 128>}, {pipeline_mode = #tpu.pipeline_mode<synchronous>, transform_indices = @transform_5, window_bounds = array<i64: 16, 32>}, {pipeline_mode = #tpu.pipeline_mode<synchronous>, transform_indices = @transform_6, window_bounds = array<i64: 16, 8>}, {pipeline_mode = #tpu.pipeline_mode<synchronous>, transform_indices = @transform_7, window_bounds = array<i64: 16, 1>}, {transform_indices = @transform_8, window_bounds = array<i64: 1, 8, 128>}]} {
    %c0 = arith.constant 0 : index
    %c0_0 = arith.constant 0 : index
    %0 = vector.load %arg1[%c0, %c0_0] : memref<8x256xf32, #tpu.memory_space<vmem>>, vector<8x256xf32>
    %c0_1 = arith.constant 0 : index
    %c0_2 = arith.constant 0 : index
    %1 = vector.load %arg2[%c0_1, %c0_2] : memref<8x256xi8, #tpu.memory_space<vmem>>, vector<8x256xi8>
    %c0_3 = arith.constant 0 : index
    %c0_4 = arith.constant 0 : index
    %2 = vector.load %arg3[%c0_3, %c0_4] : memref<32x256xf32, #tpu.memory_space<vmem>>, vector<32x256xf32>
    %c0_5 = arith.constant 0 : index
    %c0_6 = arith.constant 0 : index
    %3 = vector.load %arg4[%c0_5, %c0_6] : memref<1x256xf32, #tpu.memory_space<vmem>>, vector<1x256xf32>
    %c1_i32 = arith.constant 1 : i32
    %4 = tpu.dynamic_rotate %0 by %c1_i32 dim 1 : vector<8x256xf32>, i32 -> vector<8x256xf32>
    %c0_7 = arith.constant 0 : index
    %c0_8 = arith.constant 0 : index
    %c0_9 = arith.constant 0 : index
    %5 = vector.load %arg5[%c0_7, %c0_8, %c0_9] : memref<1x8x128xf32, #tpu.memory_space<vmem>>, vector<1x8x128xf32>
    %6 = vector.extract_strided_slice %5 {offsets = [0, 0, 0], sizes = [1, 8, 1], strides = [1, 1, 1]} : vector<1x8x128xf32> to vector<1x8x1xf32>
    %7 = vector.shape_cast %6 : vector<1x8x1xf32> to vector<8x1xf32>
    %8 = tpu.iota {dimensions = array<i32: 1>} : vector<8x256xi32>
    %c0_i32 = arith.constant 0 : i32
    %9 = vector.broadcast %c0_i32 : i32 to vector<8x256xi32>
    %10 = arith.cmpi eq, %8, %9 : vector<8x256xi32>
    %11 = vector.shape_cast %7 : vector<8x1xf32> to vector<8x1xf32>
    %12 = vector.broadcast %11 : vector<8x1xf32> to vector<8x256xf32>
    %13 = arith.select %10, %12, %4 : vector<8x256xi1>, vector<8x256xf32>
    %c0_i8 = arith.constant 0 : i8
    %14 = vector.broadcast %c0_i8 : i8 to vector<8x256xi8>
    %15 = arith.cmpi ne, %1, %14 : vector<8x256xi8>
    %16 = arith.select %15, %0, %13 : vector<8x256xi1>, vector<8x256xf32>
    %17 = arith.sitofp %1 : vector<8x256xi8> to vector<8x256xf32>
    %cst = arith.constant 2.000000e+00 : f32
    %18 = vector.broadcast %cst : f32 to vector<8x256xf32>
    %19 = arith.mulf %18, %17 : vector<8x256xf32>
    %cst_10 = arith.constant 1.000000e+00 : f32
    %20 = vector.broadcast %cst_10 : f32 to vector<8x256xf32>
    %21 = arith.subf %19, %20 : vector<8x256xf32>
    %c0_11 = arith.constant 0 : index
    %c0_12 = arith.constant 0 : index
    %22 = vector.load %arg6[%c0_11, %c0_12] : memref<16x32xf32, #tpu.memory_space<vmem>>, vector<16x32xf32>
    %cst_13 = arith.constant dense<0.000000e+00> : vector<16x256xf32>
    %23 = tpu.matmul %22, %2, %cst_13 {dimension_numbers = #tpu.dot_dimension_numbers<[1], [0], [0], [1], [0, 0, 1, 1], [], []>} : vector<16x32xf32>, vector<32x256xf32>, vector<16x256xf32> -> vector<16x256xf32>
    %c0_14 = arith.constant 0 : index
    %c0_15 = arith.constant 0 : index
    %24 = vector.load %arg7[%c0_14, %c0_15] : memref<16x8xf32, #tpu.memory_space<vmem>>, vector<16x8xf32>
    %cst_16 = arith.constant dense<0.000000e+00> : vector<16x256xf32>
    %25 = tpu.matmul %24, %21, %cst_16 {dimension_numbers = #tpu.dot_dimension_numbers<[1], [0], [0], [1], [0, 0, 1, 1], [], []>} : vector<16x8xf32>, vector<8x256xf32>, vector<16x256xf32> -> vector<16x256xf32>
    %26 = arith.addf %23, %25 : vector<16x256xf32>
    %c0_17 = arith.constant 0 : index
    %c0_18 = arith.constant 0 : index
    %27 = vector.load %arg8[%c0_17, %c0_18] : memref<16x1xf32, #tpu.memory_space<vmem>>, vector<16x1xf32>
    %28 = vector.broadcast %27 : vector<16x1xf32> to vector<16x256xf32>
    %29 = arith.addf %26, %28 : vector<16x256xf32>
    %30 = vector.extract_strided_slice %29 {offsets = [0, 0], sizes = [8, 256], strides = [1, 1]} : vector<16x256xf32> to vector<8x256xf32>
    %31 = vector.extract_strided_slice %29 {offsets = [8, 0], sizes = [8, 256], strides = [1, 1]} : vector<16x256xf32> to vector<8x256xf32>
    %32 = arith.subf %16, %30 : vector<8x256xf32>
    %cst_19 = arith.constant 0.000000e+00 : f32
    %33 = vector.broadcast %cst_19 : f32 to vector<8x256xf32>
    %34 = arith.subf %33, %31 : vector<8x256xf32>
    %35 = math.exp %34 : vector<8x256xf32>
    %36 = arith.mulf %32, %35 : vector<8x256xf32>
    %37 = arith.mulf %36, %36 : vector<8x256xf32>
    %cst_20 = arith.constant -5.000000e-01 : f32
    %38 = vector.broadcast %cst_20 : f32 to vector<8x256xf32>
    %39 = arith.mulf %38, %37 : vector<8x256xf32>
    %40 = arith.subf %39, %31 : vector<8x256xf32>
    %41 = vector.broadcast %3 : vector<1x256xf32> to vector<8x256xf32>
    %42 = arith.mulf %40, %41 : vector<8x256xf32>
    %43 = vector.extract_strided_slice %42 {offsets = [0, 0], sizes = [8, 128], strides = [1, 1]} : vector<8x256xf32> to vector<8x128xf32>
    %44 = vector.extract_strided_slice %42 {offsets = [0, 128], sizes = [8, 128], strides = [1, 1]} : vector<8x256xf32> to vector<8x128xf32>
    %45 = arith.addf %43, %44 : vector<8x128xf32>
    %c0_21 = arith.constant 0 : index
    %c0_22 = arith.constant 0 : index
    %c0_23 = arith.constant 0 : index
    %46 = vector.load %arg9[%c0_21, %c0_22, %c0_23] : memref<1x8x128xf32, #tpu.memory_space<vmem>>, vector<1x8x128xf32>
    %47 = vector.shape_cast %46 : vector<1x8x128xf32> to vector<8x128xf32>
    %48 = vector.shape_cast %45 : vector<8x128xf32> to vector<1x8x128xf32>
    tpu.vector_store %arg9[%c0_21, %c0_22, %c0_23], %48 {strides = array<i32>} : memref<1x8x128xf32, #tpu.memory_space<vmem>>, vector<1x8x128xf32>,
    return
  }
  func.func @transform_0(%arg0: i32) -> (i32, i32) {
    %c0_i32 = arith.constant 0 : i32
    %c0_i32_0 = arith.constant 0 : i32
    return %c0_i32, %arg0 : i32, i32
  }
  func.func @transform_1(%arg0: i32) -> (i32, i32) {
    %c0_i32 = arith.constant 0 : i32
    %c0_i32_0 = arith.constant 0 : i32
    return %c0_i32, %arg0 : i32, i32
  }
  func.func @transform_2(%arg0: i32) -> (i32, i32) {
    %c0_i32 = arith.constant 0 : i32
    %c0_i32_0 = arith.constant 0 : i32
    return %c0_i32, %arg0 : i32, i32
  }
  func.func @transform_3(%arg0: i32) -> (i32, i32) {
    %c0_i32 = arith.constant 0 : i32
    %c0_i32_0 = arith.constant 0 : i32
    return %c0_i32, %arg0 : i32, i32
  }
  func.func @transform_4(%arg0: i32) -> (i32, i32, i32) {
    %c0_i32 = arith.constant 0 : i32
    %c0_i32_0 = arith.constant 0 : i32
    %c0_i32_1 = arith.constant 0 : i32
    return %arg0, %c0_i32, %c0_i32_0 : i32, i32, i32
  }
  func.func @transform_5(%arg0: i32) -> (i32, i32) {
    %c0_i32 = arith.constant 0 : i32
    %c0_i32_0 = arith.constant 0 : i32
    %c0_i32_1 = arith.constant 0 : i32
    return %c0_i32, %c0_i32_0 : i32, i32
  }
  func.func @transform_6(%arg0: i32) -> (i32, i32) {
    %c0_i32 = arith.constant 0 : i32
    %c0_i32_0 = arith.constant 0 : i32
    %c0_i32_1 = arith.constant 0 : i32
    return %c0_i32, %c0_i32_0 : i32, i32
  }
  func.func @transform_7(%arg0: i32) -> (i32, i32) {
    %c0_i32 = arith.constant 0 : i32
    %c0_i32_0 = arith.constant 0 : i32
    %c0_i32_1 = arith.constant 0 : i32
    return %c0_i32, %c0_i32_0 : i32, i32
  }
  func.func @transform_8(%arg0: i32) -> (i32, i32, i32) {
    %c0_i32 = arith.constant 0 : i32
    %c0_i32_0 = arith.constant 0 : i32
    %c0_i32_1 = arith.constant 0 : i32
    return %arg0, %c0_i32, %c0_i32_0 : i32, i32, i32
  }
}

</mosaic_0001>

<llo_original>
// kernel: tpu_custom_call.1
$region0: #{tpu_custom_call.1}
  #allocation0 [shape = 'u32[]', space=smem, size = 0x4, offset = 0x4, fixed_abs, tag = 'smem constant byte address 0x4 - core index']
  #allocation1 [shape = 'u32[144,128]{1,0:T(1,128)}', space=vmem, size = 0x12000, scoped, tag = 'internal scratch']
  %s0 = inlined_call_operand.hbm [shape: f32[8,1024], index: 0, kind: input, shape index: {}]
  %s1 = inlined_call_operand.vmem [shape: s8[8,1024], index: 1, kind: input, shape index: {}]
  %s2 = inlined_call_operand.hbm [shape: f32[32,1024], index: 2, kind: input, shape index: {}]
  %s3 = inlined_call_operand.vmem [shape: f32[1,1024], index: 3, kind: input, shape index: {}]
  %s4 = inlined_call_operand.vmem [shape: f32[4,8,128], index: 4, kind: input, shape index: {}]
  %s5 = inlined_call_operand.hbm [shape: f32[16,32], index: 5, kind: input, shape index: {}]
  %s6 = inlined_call_operand.vmem [shape: f32[16,8], index: 6, kind: input, shape index: {}]
  %s7 = inlined_call_operand.vmem [shape: f32[16,1], index: 7, kind: input, shape index: {}]
  %s8 = inlined_call_operand.hbm [shape: f32[4,8,128], index: 8, kind: output, shape index: {}]
  %s9 = sld [smem:[#allocation0]]
  $region77: #{tpu_custom_call.1} parent=0
    _
  %s11 = ssub.s32 1, %s9
  %s12 = scalar_select 0, %s11, %s9
  $region1: #{tpu_custom_call.1} parent=0
    #allocation2 [shape = 'u8[16384]{0}', space=vmem, size = 0x4000, scoped, tag = 'input window, operand 0']
    #allocation3 [shape = 's32[2]{0}', space=sflag, size = 0x8, scoped, tag = 'scoped memory for tpu_custom_call.1']
    #allocation4 [shape = 's32[2]{0}', space=sflag, size = 0x8, scoped, tag = 'scoped memory for tpu_custom_call.1']
    #allocation5 [shape = 'u8[65536]{0}', space=vmem, size = 0x10000, scoped, tag = 'input window, operand 2']
    #allocation6 [shape = 's32[2]{0}', space=sflag, size = 0x8, scoped, tag = 'scoped memory for tpu_custom_call.1']
    #allocation7 [shape = 'u8[8192]{0}', space=vmem, size = 0x2000, scoped, tag = 'input window, operand 5, single buffered']
    #allocation8 [shape = 'u8[8192]{0}', space=vmem, size = 0x2000, scoped, tag = 'output window, operand 0']
    %13 = vsyncpa [#allocation3], 0
    %s14 = scalar_lea.sflag [#allocation3], 1
    %15 = vsyncpa %s14, 0
    %16 = vsyncpa [#allocation6], 0
    %s17 = scalar_lea.sflag [#allocation6], 1
    %18 = vsyncpa %s17, 0
    %19 = vsyncpa [#allocation4], 0
    %s20 = scalar_lea.sflag [#allocation4], 1
    %21 = vsyncpa %s20, 0
    loop: start=0, step=1, limit=6
    $region2: #{tpu_custom_call.1} parent=1 // loop_pre_header
      _
    $region3: #{tpu_custom_call.1} parent=1 // loop_header
      %s23 = sphi 0, %s27
      %p24 = scmp.ge.s32.totalorder %s23, 6
      %s33 = sphi 0, %s35
      %s36 = sphi 0, %s33
      %s37 = sphi 0, %s36
      %s53 = sphi 0, %s37
      %s59 = sphi 0, %s61
      %s62 = sphi 0, %s59
      %s63 = sphi 0, %s62
      %s79 = sphi 0, %s63
      %s85 = sphi 0, %s87
      %s88 = sphi 0, %s85
      %s89 = sphi 0, %s88
      %s105 = sphi 0, %s89
      %s111 = sphi 0, %s113
      %s114 = sphi 0, %s111
      %s115 = sphi 0, %s114
      %s131 = sphi 0, %s115
      %s137 = sphi 0, %s139
      %s140 = sphi 0, %s137
      %s141 = sphi 0, %s140
      %s157 = sphi 0, %s141
      %s161 = sphi 0, %s161
      %s163 = sphi 0, %s161
      %s164 = sphi 0, %s163
      %s178 = sphi 0, %s164
      %s182 = sphi 0, %s182
      %s184 = sphi 0, %s182
      %s185 = sphi 0, %s184
      %s199 = sphi 0, %s185
      %s203 = sphi 0, %s203
      %s205 = sphi 0, %s203
      %s206 = sphi 0, %s205
      %s220 = sphi 0, %s206
      %s226 = sphi 0, %s228
      %s229 = sphi 0, %s226
      %s230 = sphi 0, %s229
      %s246 = sphi 0, %s230
    $region4: #{tpu_custom_call.1} parent=1 // loop_header_branch
      %26 = sbr.rel (%p24) target = $region8
    $region5: #{tpu_custom_call.1} parent=1 // loop_body
      %s28 = ssub.s32 %s23, 1
      %s29 = ssub.s32 %s23, 2
      %s30 = sadd.s32 %s23, 1
      %s31 = ssub.s32 %s23, %s30
      %p32 = scmp.eq.s32.totalorder %s31, 0
      %s34 = sadd.s32 %s33, 1
      %s35 = scalar_select %p32, %s33, %s34
      %p38 = pneg %p32
      %p39 = scmp.eq.s32.totalorder %s23, 3
      %p40 = por %p38, %p39
      %p41 = scmp.ne.s32.totalorder %s33, %s36
      %p42 = scmp.eq.s32.totalorder %s23, 0
      %p43 = por %p41, %p42
      %p44 = scmp.ne.s32.totalorder %s33, %s36
      %p45 = scmp.eq.s32.totalorder %s28, 3
      %p46 = por %p44, %p45
      %p47 = scmp.ne.s32.totalorder %s36, %s37
      %p48 = scmp.eq.s32.totalorder %s28, 0
      %p49 = por %p47, %p48
      %p50 = scmp.ne.s32.totalorder %s36, %s37
      %p51 = scmp.eq.s32.totalorder %s29, 3
      %p52 = por %p50, %p51
      %p54 = scmp.ne.s32.totalorder %s37, %s53
      %p55 = scmp.eq.s32.totalorder %s29, 0
      %p56 = por %p54, %p55
      %s57 = ssub.s32 %s23, %s30
      %p58 = scmp.eq.s32.totalorder %s57, 0
      %s60 = sadd.s32 %s59, 1
      %s61 = scalar_select %p58, %s59, %s60
      %p64 = pneg %p58
      %p65 = scmp.eq.s32.totalorder %s23, 3
      %p66 = por %p64, %p65
      %p67 = scmp.ne.s32.totalorder %s59, %s62
      %p68 = scmp.eq.s32.totalorder %s23, 0
      %p69 = por %p67, %p68
      %p70 = scmp.ne.s32.totalorder %s59, %s62
      %p71 = scmp.eq.s32.totalorder %s28, 3
      %p72 = por %p70, %p71
      %p73 = scmp.ne.s32.totalorder %s62, %s63
      %p74 = scmp.eq.s32.totalorder %s28, 0
      %p75 = por %p73, %p74
      %p76 = scmp.ne.s32.totalorder %s62, %s63
      %p77 = scmp.eq.s32.totalorder %s29, 3
      %p78 = por %p76, %p77
      %p80 = scmp.ne.s32.totalorder %s63, %s79
      %p81 = scmp.eq.s32.totalorder %s29, 0
      %p82 = por %p80, %p81
      %s83 = ssub.s32 %s23, %s30
      %p84 = scmp.eq.s32.totalorder %s83, 0
      %s86 = sadd.s32 %s85, 1
      %s87 = scalar_select %p84, %s85, %s86
      %p90 = pneg %p84
      %p91 = scmp.eq.s32.totalorder %s23, 3
      %p92 = por %p90, %p91
      %p93 = scmp.ne.s32.totalorder %s85, %s88
      %p94 = scmp.eq.s32.totalorder %s23, 0
      %p95 = por %p93, %p94
      %p96 = scmp.ne.s32.totalorder %s85, %s88
      %p97 = scmp.eq.s32.totalorder %s28, 3
      %p98 = por %p96, %p97
      %p99 = scmp.ne.s32.totalorder %s88, %s89
      %p100 = scmp.eq.s32.totalorder %s28, 0
      %p101 = por %p99, %p100
      %p102 = scmp.ne.s32.totalorder %s88, %s89
      %p103 = scmp.eq.s32.totalorder %s29, 3
      %p104 = por %p102, %p103
      %p106 = scmp.ne.s32.totalorder %s89, %s105
      %p107 = scmp.eq.s32.totalorder %s29, 0
      %p108 = por %p106, %p107
      %s109 = ssub.s32 %s23, %s30
      %p110 = scmp.eq.s32.totalorder %s109, 0
      %s112 = sadd.s32 %s111, 1
      %s113 = scalar_select %p110, %s111, %s112
      %p116 = pneg %p110
      %p117 = scmp.eq.s32.totalorder %s23, 3
      %p118 = por %p116, %p117
      %p119 = scmp.ne.s32.totalorder %s111, %s114
      %p120 = scmp.eq.s32.totalorder %s23, 0
      %p121 = por %p119, %p120
      %p122 = scmp.ne.s32.totalorder %s111, %s114
      %p123 = scmp.eq.s32.totalorder %s28, 3
      %p124 = por %p122, %p123
      %p125 = scmp.ne.s32.totalorder %s114, %s115
      %p126 = scmp.eq.s32.totalorder %s28, 0
      %p127 = por %p125, %p126
      %p128 = scmp.ne.s32.totalorder %s114, %s115
      %p129 = scmp.eq.s32.totalorder %s29, 3
      %p130 = por %p128, %p129
      %p132 = scmp.ne.s32.totalorder %s115, %s131
      %p133 = scmp.eq.s32.totalorder %s29, 0
      %p134 = por %p132, %p133
      %s135 = ssub.s32 %s23, %s30
      %p136 = scmp.eq.s32.totalorder %s135, 0
      %s138 = sadd.s32 %s137, 1
      %s139 = scalar_select %p136, %s137, %s138
      %p142 = pneg %p136
      %p143 = scmp.eq.s32.totalorder %s23, 3
      %p144 = por %p142, %p143
      %p145 = scmp.ne.s32.totalorder %s137, %s140
      %p146 = scmp.eq.s32.totalorder %s23, 0
      %p147 = por %p145, %p146
      %p148 = scmp.ne.s32.totalorder %s137, %s140
      %p149 = scmp.eq.s32.totalorder %s28, 3
      %p150 = por %p148, %p149
      %p151 = scmp.ne.s32.totalorder %s140, %s141
      %p152 = scmp.eq.s32.totalorder %s28, 0
      %p153 = por %p151, %p152
      %p154 = scmp.ne.s32.totalorder %s140, %s141
      %p155 = scmp.eq.s32.totalorder %s29, 3
      %p156 = por %p154, %p155
      %p158 = scmp.ne.s32.totalorder %s141, %s157
      %p159 = scmp.eq.s32.totalorder %s29, 0
      %p160 = por %p158, %p159
      %s162 = sadd.s32 %s161, 1
      %p165 = scmp.eq.s32.totalorder %s23, 3
      %p166 = scmp.ne.s32.totalorder %s161, %s163
      %p167 = scmp.eq.s32.totalorder %s23, 0
      %p168 = por %p166, %p167
      %p169 = scmp.ne.s32.totalorder %s161, %s163
      %p170 = scmp.eq.s32.totalorder %s28, 3
      %p171 = por %p169, %p170
      %p172 = scmp.ne.s32.totalorder %s163, %s164
      %p173 = scmp.eq.s32.totalorder %s28, 0
      %p174 = por %p172, %p173
      %p175 = scmp.ne.s32.totalorder %s163, %s164
      %p176 = scmp.eq.s32.totalorder %s29, 3
      %p177 = por %p175, %p176
      %p179 = scmp.ne.s32.totalorder %s164, %s178
      %p180 = scmp.eq.s32.totalorder %s29, 0
      %p181 = por %p179, %p180
      %s183 = sadd.s32 %s182, 1
      %p186 = scmp.eq.s32.totalorder %s23, 3
      %p187 = scmp.ne.s32.totalorder %s182, %s184
      %p188 = scmp.eq.s32.totalorder %s23, 0
      %p189 = por %p187, %p188
      %p190 = scmp.ne.s32.totalorder %s182, %s184
      %p191 = scmp.eq.s32.totalorder %s28, 3
      %p192 = por %p190, %p191
      %p193 = scmp.ne.s32.totalorder %s184, %s185
      %p194 = scmp.eq.s32.totalorder %s28, 0
      %p195 = por %p193, %p194
      %p196 = scmp.ne.s32.totalorder %s184, %s185
      %p197 = scmp.eq.s32.totalorder %s29, 3
      %p198 = por %p196, %p197
      %p200 = scmp.ne.s32.totalorder %s185, %s199
      %p201 = scmp.eq.s32.totalorder %s29, 0
      %p202 = por %p200, %p201
      %s204 = sadd.s32 %s203, 1
      %p207 = scmp.eq.s32.totalorder %s23, 3
      %p208 = scmp.ne.s32.totalorder %s203, %s205
      %p209 = scmp.eq.s32.totalorder %s23, 0
      %p210 = por %p208, %p209
      %p211 = scmp.ne.s32.totalorder %s203, %s205
      %p212 = scmp.eq.s32.totalorder %s28, 3
      %p213 = por %p211, %p212
      %p214 = scmp.ne.s32.totalorder %s205, %s206
      %p215 = scmp.eq.s32.totalorder %s28, 0
      %p216 = por %p214, %p215
      %p217 = scmp.ne.s32.totalorder %s205, %s206
      %p218 = scmp.eq.s32.totalorder %s29, 3
      %p219 = por %p217, %p218
      %p221 = scmp.ne.s32.totalorder %s206, %s220
      %p222 = scmp.eq.s32.totalorder %s29, 0
      %p223 = por %p221, %p222
      %s224 = ssub.s32 %s23, %s30
      %p225 = scmp.eq.s32.totalorder %s224, 0
      %s227 = sadd.s32 %s226, 1
      %s228 = scalar_select %p225, %s226, %s227
      %p231 = pneg %p225
      %p232 = scmp.eq.s32.totalorder %s23, 3
      %p233 = por %p231, %p232
      %p234 = scmp.ne.s32.totalorder %s226, %s229
      %p235 = scmp.eq.s32.totalorder %s23, 0
      %p236 = por %p234, %p235
      %p237 = scmp.ne.s32.totalorder %s226, %s229
      %p238 = scmp.eq.s32.totalorder %s28, 3
      %p239 = por %p237, %p238
      %p240 = scmp.ne.s32.totalorder %s229, %s230
      %p241 = scmp.eq.s32.totalorder %s28, 0
      %p242 = por %p240, %p241
      %p243 = scmp.ne.s32.totalorder %s229, %s230
      %p244 = scmp.eq.s32.totalorder %s29, 3
      %p245 = por %p243, %p244
      %p247 = scmp.ne.s32.totalorder %s230, %s246
      %p248 = scmp.eq.s32.totalorder %s29, 0
      %p249 = por %p247, %p248
      %p250 = scmp.le.s32.totalorder 1, %s23
      %p251 = scmp.lt.s32.totalorder %s23, 5
      %p252 = pnand %p250, %p251
      %p253 = pneg %p252
      // Predicated region
      $region9: #{tpu_custom_call.1} parent=5 // pred_check
        _
      $region10: #{tpu_custom_call.1} parent=5 // pred_check_branch
        %255 = sbr.rel (%p252) target = $region12
      $region11: #{tpu_custom_call.1} parent=5 // pred_region
        %s256 = ssub.s32 %s23, 1
        // Predicated region
        $region13: #{tpu_custom_call.1} parent=11 // pred_check
          %p257 = pneg %p174
        $region14: #{tpu_custom_call.1} parent=11 // pred_check_branch
          %259 = sbr.rel (%p257) target = $region16
        $region15: #{tpu_custom_call.1} parent=11 // pred_region
          %s261 = ssub.s32 256, 256
          %262 = vsyncadd [#allocation6], %s261
          %s263 = sshll.u32 [#allocation7], 4
          %s264 = int_to_ptr.vmem [resolvable:$true] %s263
          %269 = dma.hbm_to_vmem [thread:$0]  %s5, 256, %s264, [#allocation6], 128, 128, 8
        $region16: #{tpu_custom_call.1} parent=11 // pred_fallthru
          _
        // Predicated region
        $region17: #{tpu_custom_call.1} parent=11 // pred_check
          %p270 = pneg %p195
        $region18: #{tpu_custom_call.1} parent=11 // pred_check_branch
          %272 = sbr.rel (%p270) target = $region20
        $region19: #{tpu_custom_call.1} parent=11 // pred_region
          _
        $region20: #{tpu_custom_call.1} parent=11 // pred_fallthru
          _
        // Predicated region
        $region21: #{tpu_custom_call.1} parent=11 // pred_check
          %p273 = pneg %p216
        $region22: #{tpu_custom_call.1} parent=11 // pred_check_branch
          %275 = sbr.rel (%p273) target = $region24
        $region23: #{tpu_custom_call.1} parent=11 // pred_region
          _
        $region24: #{tpu_custom_call.1} parent=11 // pred_fallthru
          _
      $region12: #{tpu_custom_call.1} parent=5 // pred_fallthru
        _
      %p276 = scmp.lt.s32.totalorder %s23, 4
      // Predicated region
      $region25: #{tpu_custom_call.1} parent=5 // pred_check
        %p277 = pneg %p276
      $region26: #{tpu_custom_call.1} parent=5 // pred_check_branch
        %279 = sbr.rel (%p277) target = $region28
      $region27: #{tpu_custom_call.1} parent=5 // pred_region
        // Predicated region
        $region29: #{tpu_custom_call.1} parent=27 // pred_check
          %p280 = pneg %p43
        $region30: #{tpu_custom_call.1} parent=27 // pred_check_branch
          %282 = sbr.rel (%p280) target = $region32
        $region31: #{tpu_custom_call.1} parent=27 // pred_region
          %s283 = sand.u32 %s33, 1
          %s284 = scalar_lea.sflag [#allocation3], %s283
          %s285 = sand.u32 %s33, 1
          %s286 = smul.addr %s285, 16
          %s287 = scalar_lea.vmem [#allocation2], %s286
          %s288 = smul.u32 2, %s23
          %s290 = ssub.s32 256, 256
          %291 = vsyncadd %s284, %s290
          %s292 = smul.addr %s288, 128
          %s293 = scalar_lea.hbm %s0, %s292
          %s295 = sshll.u32 %s287, 4
          %s296 = int_to_ptr.vmem [resolvable:$true] %s295
          %298 = dma.hbm_to_vmem [thread:$0]  %s293, 256, %s296, %s284
        $region32: #{tpu_custom_call.1} parent=27 // pred_fallthru
          _
        // Predicated region
        $region33: #{tpu_custom_call.1} parent=27 // pred_check
          %p299 = pneg %p69
        $region34: #{tpu_custom_call.1} parent=27 // pred_check_branch
          %301 = sbr.rel (%p299) target = $region36
        $region35: #{tpu_custom_call.1} parent=27 // pred_region
          %s302 = smul.u32 2, %s23
          %p303 = scmp.lt.s32.totalorder %s302, 7
          %s304 = scalar_select %p303, %s302, 7
          %s305 = smul.addr %s304, 2
          %s306 = scalar_lea.vmem %s1, %s305
          %s307 = smul.u32 2, %s23
        $region36: #{tpu_custom_call.1} parent=27 // pred_fallthru
          _
        // Predicated region
        $region37: #{tpu_custom_call.1} parent=27 // pred_check
          %p308 = pneg %p95
        $region38: #{tpu_custom_call.1} parent=27 // pred_check_branch
          %310 = sbr.rel (%p308) target = $region40
        $region39: #{tpu_custom_call.1} parent=27 // pred_region
          %s311 = sand.u32 %s23, 1
          %s312 = scalar_lea.sflag [#allocation6], %s311
          %s313 = sand.u32 %s85, 1
          %s314 = smul.addr %s313, 64
          %s315 = scalar_lea.vmem [#allocation5], %s314
          %s316 = smul.u32 2, %s23
          %s318 = ssub.s32 1024, 1024
          %319 = vsyncadd %s312, %s318
          %s320 = smul.addr %s316, 128
          %s321 = scalar_lea.hbm %s2, %s320
          %s322 = sshll.u32 %s315, 4
          %s323 = int_to_ptr.vmem [resolvable:$true] %s322
          %328 = dma.hbm_to_vmem [thread:$0]  %s321, 1024, %s323, %s312, 1024, 256, 16
        $region40: #{tpu_custom_call.1} parent=27 // pred_fallthru
          _
        // Predicated region
        $region41: #{tpu_custom_call.1} parent=27 // pred_check
          %p329 = pneg %p121
        $region42: #{tpu_custom_call.1} parent=27 // pred_check_branch
          %331 = sbr.rel (%p329) target = $region44
        $region43: #{tpu_custom_call.1} parent=27 // pred_region
          %s332 = smul.u32 2, %s23
          %p333 = scmp.lt.s32.totalorder %s332, 7
          %s334 = scalar_select %p333, %s332, 7
          %s335 = scalar_lea.vmem %s3, %s334
          %s336 = smul.u32 2, %s23
        $region44: #{tpu_custom_call.1} parent=27 // pred_fallthru
          _
        // Predicated region
        $region45: #{tpu_custom_call.1} parent=27 // pred_check
          %p337 = pneg %p147
        $region46: #{tpu_custom_call.1} parent=27 // pred_check_branch
          %339 = sbr.rel (%p337) target = $region48
        $region47: #{tpu_custom_call.1} parent=27 // pred_region
          %p340 = scmp.lt.s32.totalorder %s23, 3
          %s341 = scalar_select %p340, %s23, 3
          %s342 = smul.addr %s341, 8
          %s343 = scalar_lea.vmem %s4, %s342
        $region48: #{tpu_custom_call.1} parent=27 // pred_fallthru
          _
      $region28: #{tpu_custom_call.1} parent=5 // pred_fallthru
        _
      %p344 = scmp.le.s32.totalorder 1, %s23
      %p345 = scmp.lt.s32.totalorder %s23, 5
      %p346 = pnand %p344, %p345
      %p347 = pneg %p346
      // Predicated region
      $region49: #{tpu_custom_call.1} parent=5 // pred_check
        _
      $region50: #{tpu_custom_call.1} parent=5 // pred_check_branch
        %349 = sbr.rel (%p346) target = $region52
      $region51: #{tpu_custom_call.1} parent=5 // pred_region
        %s350 = ssub.s32 %s23, 1
        %s351 = sand.u32 %s36, 1
        %s352 = scalar_lea.sflag [#allocation3], %s351
        %s353 = sand.u32 %s36, 1
        %s354 = smul.addr %s353, 16
        %s355 = scalar_lea.vmem [#allocation2], %s354
        // Predicated region
        $region53: #{tpu_custom_call.1} parent=51 // pred_check
          %p356 = pneg %p49
        $region54: #{tpu_custom_call.1} parent=51 // pred_check_branch
          %358 = sbr.rel (%p356) target = $region56
        $region55: #{tpu_custom_call.1} parent=51 // pred_region
          %359 = dma.done %s352, 256
        $region56: #{tpu_custom_call.1} parent=51 // pred_fallthru
          _
        %s360 = sand.u32 %s28, 1
        %s361 = scalar_lea.sflag [#allocation6], %s360
        %s362 = sand.u32 %s88, 1
        %s363 = smul.addr %s362, 64
        %s364 = scalar_lea.vmem [#allocation5], %s363
        // Predicated region
        $region57: #{tpu_custom_call.1} parent=51 // pred_check
          %p365 = pneg %p101
        $region58: #{tpu_custom_call.1} parent=51 // pred_check_branch
          %367 = sbr.rel (%p365) target = $region60
        $region59: #{tpu_custom_call.1} parent=51 // pred_region
          %368 = dma.done %s361, 1024
        $region60: #{tpu_custom_call.1} parent=51 // pred_fallthru
          _
        // Predicated region
        $region61: #{tpu_custom_call.1} parent=51 // pred_check
          %p369 = pneg %p174
        $region62: #{tpu_custom_call.1} parent=51 // pred_check_branch
          %371 = sbr.rel (%p369) target = $region64
        $region63: #{tpu_custom_call.1} parent=51 // pred_region
          %372 = dma.done [#allocation6], 256
        $region64: #{tpu_custom_call.1} parent=51 // pred_fallthru
          _
        %s373 = sand.u32 %s36, 1
        %s374 = scalar_lea.sflag [#allocation3], %s373
        %s375 = sand.u32 %s36, 1
        %s376 = smul.addr %s375, 16
        %s377 = scalar_lea.vmem [#allocation2], %s376
        %p378 = pneg %p49
        %p379 = pneg %p46
        %s380 = smul.u32 2, %s28
        %p381 = scmp.lt.s32.totalorder %s380, 7
        %s382 = scalar_select %p381, %s380, 7
        %s383 = smul.addr %s382, 2
        %s384 = scalar_lea.vmem %s1, %s383
        %p385 = pneg %p75
        %p386 = pneg %p72
        %s387 = sand.u32 %s28, 1
        %s388 = scalar_lea.sflag [#allocation6], %s387
        %s389 = sand.u32 %s88, 1
        %s390 = smul.addr %s389, 64
        %s391 = scalar_lea.vmem [#allocation5], %s390
        %p392 = pneg %p101
        %p393 = pneg %p98
        %s394 = smul.u32 2, %s28
        %p395 = scmp.lt.s32.totalorder %s394, 7
        %s396 = scalar_select %p395, %s394, 7
        %s397 = scalar_lea.vmem %s3, %s396
        %p398 = pneg %p127
        %p399 = pneg %p124
        %p400 = scmp.lt.s32.totalorder %s28, 3
        %s401 = scalar_select %p400, %s28, 3
        %s402 = smul.addr %s401, 8
        %s403 = scalar_lea.vmem %s4, %s402
        %p404 = pneg %p153
        %p405 = pneg %p150
        %p406 = pneg %p174
        %p407 = pneg %p171
        %p408 = pneg %p195
        %p409 = pneg %p192
        %p410 = pneg %p216
        %p411 = pneg %p213
        %p412 = pneg %p242
        %p413 = pneg %p239
        %s414 = sand.u32 %s229, 1
        %s415 = scalar_lea.sflag [#allocation4], %s414
        %s416 = sand.u32 %s229, 1
        %s417 = smul.addr %s416, 8
        %s418 = scalar_lea.vmem [#allocation8], %s417
        %s419 = smul.u32 2, %s28
        %s420 = smul.u32 2, %s28
        %p421 = scmp.lt.s32.totalorder %s420, 7
        %s422 = scalar_select %p421, %s420, 7
        %s423 = smul.addr %s422, 2
        %s424 = scalar_lea.vmem %s1, %s423
        %s425 = smul.u32 2, %s28
        %s426 = smul.u32 2, %s28
        %s427 = smul.u32 2, %s28
        %p428 = scmp.lt.s32.totalorder %s427, 7
        %s429 = scalar_select %p428, %s427, 7
        %s430 = scalar_lea.vmem %s3, %s429
        %s431 = smul.u32 2, %s28
        %p432 = scmp.lt.s32.totalorder %s28, 3
        %s433 = scalar_select %p432, %s28, 3
        %s434 = smul.addr %s433, 8
        %s435 = scalar_lea.vmem %s4, %s434
        %v438 = vld [vmem:[%s355] sm:$0xff]
        %v439 = vld [vmem:[%s355 + $0x8] sm:$0xff]
        %v440 = vld [vmem:[%s424] sm:$0xf]
        %v441 = vld [vmem:[%s364] sm:$0xff]
        %v442 = vld [vmem:[%s364 + $0x8] sm:$0xff]
        %v443 = vld [vmem:[%s364 + $0x10] sm:$0xff]
        %v444 = vld [vmem:[%s364 + $0x18] sm:$0xff]
        %v445 = vld [vmem:[%s364 + $0x20] sm:$0xff]
        %v446 = vld [vmem:[%s364 + $0x28] sm:$0xff]
        %v447 = vld [vmem:[%s364 + $0x30] sm:$0xff]
        %v448 = vld [vmem:[%s364 + $0x38] sm:$0xff]
        %v449 = vld [vmem:[%s430] sm:$0x3]
        %450 = vrot.lane.b32.xlu0 %v438, 1
        %v451 = vpop.permute.xlu0 %450
        %452 = vrot.lane.b32.xlu0 %v439, 1
        %v453 = vpop.permute.xlu0 %452
        %v454 = vlaneseq
        %v455 = vand.u32 %v454, 127
        %vm456 = vcmp.lt.s32.totalorder %v455, 1
        %v457 = vsel %vm456, %v451, %v453
        %v458 = vsel %vm456, %v453, %v451
        %v459 = vld [vmem:[%s435] sm:$0xff]
        %v460 = vadd.s32 %v455, 128
        %vm461 = vcmp.eq.s32.totalorder %v455, 0
        %vm462 = vcmp.eq.s32.totalorder %v460, 0
        %464 = vset.pattern.permute.xlu0 0
        %465 = vperm.xlu0 %464, %v459
        %v466 = vpop.permute.xlu0 %465
        %v468 = vsel %vm461, %v466, %v458
        %v469 = vsel %vm462, %v466, %v457
        %vm470 = vnez %v440
        %v471 = vsel %vm470, 16843009, 0
        %v472 = vunpack.c.0.s8 %v471
        %v473 = vunpack.c.1.s8 %v471
        %vm474 = vcmp.ne.s32.totalorder %v472, 0
        %vm475 = vcmp.ne.s32.totalorder %v473, 0
        %v476 = vsel %vm474, %v438, %v468
        %v477 = vsel %vm475, %v439, %v469
        %v478 = vunpack.c.0.s8 %v440
        %v479 = vunpack.c.1.s8 %v440
        %v480 = vcvt.s32.f32 %v478
        %v481 = vcvt.s32.f32 %v479
        %v482 = vmul.f32 %v480, 2.0
        %v483 = vmul.f32 %v481, 2.0
        %v484 = vsub.f32 %v482, 1.0
        %v485 = vsub.f32 %v483, 1.0
        %v486 = vld [vmem:[#allocation7] sm:$0xff]
        %v487 = vld [vmem:[#allocation7 + $0x8] sm:$0xff]
        %v488 = vld [vmem:[%s6] sm:$0xff]
        %v489 = vld [vmem:[%s6 + $0x8] sm:$0xff]
        %vm490 = vcmask 64512
        %v492 = vsel %vm490, %v488, 0
        %v495 = vsel %vm490, %v489, 0
        %497 = vmatprep.subr.mxu0 %v485
        %498 = vmatpush1.msra.mxu0 %v484
        %499 = vmatprep.subr.mxu0 0.0
        %500 = vmatpush1.msra.mxu0 0.0
        %501 = vmatprep.subr.mxu0 0.0
        %502 = vmatpush1.msra.mxu0 0.0
        %503 = vmatprep.subr.mxu0 0.0
        %504 = vmatpush1.msra.mxu0 0.0
        %505 = vmatprep.subr.mxu0 0.0
        %506 = vmatpush1.msra.mxu0 0.0
        %507 = vmatprep.subr.mxu0 0.0
        %508 = vmatpush1.msra.mxu0 0.0
        %509 = vmatprep.subr.mxu0 0.0
        %510 = vmatpush1.msra.mxu0 0.0
        %511 = vmatprep.subr.mxu0 0.0
        %512 = vmatpush1.msra.mxu0 0.0
        %513 = vmatprep.subr.mxu0 0.0
        %514 = vmatpush1.msra.mxu0 0.0
        %515 = vmatprep.subr.mxu0 0.0
        %516 = vmatpush1.msra.mxu0 0.0
        %517 = vmatprep.subr.mxu0 0.0
        %518 = vmatpush1.msra.mxu0 0.0
        %519 = vmatprep.subr.mxu0 0.0
        %520 = vmatpush1.msra.mxu0 0.0
        %521 = vmatprep.subr.mxu0 0.0
        %522 = vmatpush1.msra.mxu0 0.0
        %523 = vmatprep.subr.mxu0 0.0
        %524 = vmatpush1.msra.mxu0 0.0
        %525 = vmatprep.subr.mxu0 0.0
        %526 = vmatpush1.msra.mxu0 0.0
        %527 = vmatprep.subr.mxu0 0.0
        %528 = vmatpush1.msra.mxu0 0.0
        %529 = vmatprep.subr.mxu0 0.0
        %530 = vmatpush1.msra.mxu0 0.0
        %531 = vmatprep.subr.mxu0 0.0
        %532 = vmatpush1.msra.mxu0 0.0
        %533 = vmatprep.subr.mxu0 0.0
        %534 = vmatpush1.msra.mxu0 0.0
        %535 = vmatprep.subr.mxu0 0.0
        %536 = vmatpush1.msra.mxu0 0.0
        %537 = vmatprep.subr.mxu0 0.0
        %538 = vmatpush1.msra.mxu0 0.0
        %539 = vmatprep.subr.mxu0 0.0
        %540 = vmatpush1.msra.mxu0 0.0
        %541 = vmatprep.subr.mxu0 0.0
        %542 = vmatpush1.msra.mxu0 0.0
        %543 = vmatprep.subr.mxu0 0.0
        %544 = vmatpush1.msra.mxu0 0.0
        %545 = vmatprep.subr.mxu0 0.0
        %546 = vmatpush1.msra.mxu0 0.0
        %547 = vmatprep.subr.mxu0 0.0
        %548 = vmatpush1.msra.mxu0 0.0
        %549 = vmatprep.subr.mxu0 0.0
        %550 = vmatpush1.msra.mxu0 0.0
        %551 = vmatprep.subr.mxu0 0.0
        %552 = vmatpush1.msra.mxu0 0.0
        %553 = vmatprep.subr.mxu0 0.0
        %554 = vmatpush1.msra.mxu0 0.0
        %555 = vmatprep.subr.mxu0 0.0
        %556 = vmatpush1.msra.mxu0 0.0
        %557 = vmatprep.subr.mxu0 0.0
        %558 = vmatpush1.msra.mxu0 0.0
        %559 = vmatprep.subr.mxu0 0.0
        %560 = vmatpush1.msra.mxu0 0.0
        %561 = vmatprep.mubr.f32.mxu0 0.0
        %562 = vmatmul.mubr.f32.gmra.mrb[0].mxu0 %v492
        %v563 = vpop.f32.mrb[0].mxu0
        %v564 = vadd.f32 0.0, %v563
        %v565 = vpop.f32.mrb[0].mxu0
        %v566 = vadd.f32 0.0, %v565
        %567 = vmatprep.mubr.f32.mxu0 0.0
        %568 = vmatmul.mubr.f32.gmra.mrb[0].mxu0 %v495
        %v569 = vpop.f32.mrb[0].mxu0
        %v570 = vadd.f32 0.0, %v569
        %v571 = vpop.f32.mrb[0].mxu0
        %v572 = vadd.f32 0.0, %v571
        %573 = vdwg.mxu0
        %vm574 = vcmask 261120
        %v576 = vsel %vm574, %v486, 0
        %v579 = vsel %vm574, %v487, 0
        %581 = vmatprep.subr.mxu0 %v442
        %582 = vmatpush1.msra.mxu0 %v441
        %583 = vmatprep.subr.mxu0 %v444
        %584 = vmatpush1.msra.mxu0 %v443
        %585 = vmatprep.subr.mxu0 %v446
        %586 = vmatpush1.msra.mxu0 %v445
        %587 = vmatprep.subr.mxu0 %v448
        %588 = vmatpush1.msra.mxu0 %v447
        %589 = vmatprep.subr.mxu0 0.0
        %590 = vmatpush1.msra.mxu0 0.0
        %591 = vmatprep.subr.mxu0 0.0
        %592 = vmatpush1.msra.mxu0 0.0
        %593 = vmatprep.subr.mxu0 0.0
        %594 = vmatpush1.msra.mxu0 0.0
        %595 = vmatprep.subr.mxu0 0.0
        %596 = vmatpush1.msra.mxu0 0.0
        %597 = vmatprep.subr.mxu0 0.0
        %598 = vmatpush1.msra.mxu0 0.0
        %599 = vmatprep.subr.mxu0 0.0
        %600 = vmatpush1.msra.mxu0 0.0
        %601 = vmatprep.subr.mxu0 0.0
        %602 = vmatpush1.msra.mxu0 0.0
        %603 = vmatprep.subr.mxu0 0.0
        %604 = vmatpush1.msra.mxu0 0.0
        %605 = vmatprep.subr.mxu0 0.0
        %606 = vmatpush1.msra.mxu0 0.0
        %607 = vmatprep.subr.mxu0 0.0
        %608 = vmatpush1.msra.mxu0 0.0
        %609 = vmatprep.subr.mxu0 0.0
        %610 = vmatpush1.msra.mxu0 0.0
        %611 = vmatprep.subr.mxu0 0.0
        %612 = vmatpush1.msra.mxu0 0.0
        %613 = vmatprep.subr.mxu0 0.0
        %614 = vmatpush1.msra.mxu0 0.0
        %615 = vmatprep.subr.mxu0 0.0
        %616 = vmatpush1.msra.mxu0 0.0
        %617 = vmatprep.subr.mxu0 0.0
        %618 = vmatpush1.msra.mxu0 0.0
        %619 = vmatprep.subr.mxu0 0.0
        %620 = vmatpush1.msra.mxu0 0.0
        %621 = vmatprep.subr.mxu0 0.0
        %622 = vmatpush1.msra.mxu0 0.0
        %623 = vmatprep.subr.mxu0 0.0
        %624 = vmatpush1.msra.mxu0 0.0
        %625 = vmatprep.subr.mxu0 0.0
        %626 = vmatpush1.msra.mxu0 0.0
        %627 = vmatprep.subr.mxu0 0.0
        %628 = vmatpush1.msra.mxu0 0.0
        %629 = vmatprep.subr.mxu0 0.0
        %630 = vmatpush1.msra.mxu0 0.0
        %631 = vmatprep.subr.mxu0 0.0
        %632 = vmatpush1.msra.mxu0 0.0
        %633 = vmatprep.subr.mxu0 0.0
        %634 = vmatpush1.msra.mxu0 0.0
        %635 = vmatprep.subr.mxu0 0.0
        %636 = vmatpush1.msra.mxu0 0.0
        %637 = vmatprep.subr.mxu0 0.0
        %638 = vmatpush1.msra.mxu0 0.0
        %639 = vmatprep.subr.mxu0 0.0
        %640 = vmatpush1.msra.mxu0 0.0
        %641 = vmatprep.subr.mxu0 0.0
        %642 = vmatpush1.msra.mxu0 0.0
        %643 = vmatprep.subr.mxu0 0.0
        %644 = vmatpush1.msra.mxu0 0.0
        %645 = vmatprep.mubr.f32.mxu0 0.0
        %646 = vmatmul.mubr.f32.gmra.mrb[0].mxu0 %v576
        %v647 = vpop.f32.mrb[0].mxu0
        %v648 = vadd.f32 %v564, %v647
        %v649 = vpop.f32.mrb[0].mxu0
        %v650 = vadd.f32 %v566, %v649
        %651 = vmatprep.mubr.f32.mxu0 0.0
        %652 = vmatmul.mubr.f32.gmra.mrb[0].mxu0 %v579
        %v653 = vpop.f32.mrb[0].mxu0
        %v654 = vadd.f32 %v570, %v653
        %v655 = vpop.f32.mrb[0].mxu0
        %v656 = vadd.f32 %v572, %v655
        %657 = vdwg.mxu0
        %v658 = vld [vmem:[%s7] sm:$0xff]
        %v659 = vld [vmem:[%s7 + $0x8] sm:$0xff]
        %661 = vset.pattern.permute.xlu0 0
        %662 = vperm.xlu0 %661, %v658
        %v663 = vpop.permute.xlu0 %662
        %666 = vset.pattern.permute.xlu0 0
        %667 = vperm.xlu0 %666, %v659
        %v668 = vpop.permute.xlu0 %667
        %v670 = vadd.f32 %v648, %v663
        %v671 = vadd.f32 %v650, %v663
        %v672 = vadd.f32 %v654, %v668
        %v673 = vadd.f32 %v656, %v668
        %v674 = vsub.f32 %v476, %v670
        %v675 = vsub.f32 %v477, %v671
        %v676 = vsub.f32 0.0, %v672
        %v677 = vsub.f32 0.0, %v673
        %v678 = vmul.f32 %v676, 1.442695
        %v679 = vpow.pop %v678
        %v680 = vmul.f32 %v677, 1.442695
        %v681 = vpow.pop %v680
        %v682 = vmul.f32 %v674, %v679
        %v683 = vmul.f32 %v675, %v681
        %v684 = vmul.f32 %v682, %v682
        %v685 = vmul.f32 %v683, %v683
        %v686 = vmul.f32 %v684, -0.5
        %v687 = vmul.f32 %v685, -0.5
        %v688 = vsub.f32 %v686, %v672
        %v689 = vsub.f32 %v687, %v673
        %v691 = vlaneseq
        %v692 = vshrl.u32 %v691, 7
        %v693 = vsub.s32 0, %v692
        %v694 = vrot.slane %v449, %v693
        %v695 = vlaneseq
        %v696 = vshrl.u32 %v695, 7
        %v697 = vsub.s32 1, %v696
        %v698 = vrot.slane %v449, %v697
        %v701 = vmul.f32 %v688, %v694
        %v702 = vmul.f32 %v689, %v698
        %v703 = vadd.f32 %v701, %v702
        %704 = vst [vmem:[%s418] sm:$0xff] %v703
        %s705 = sand.u32 %s229, 1
        %s706 = scalar_lea.sflag [#allocation4], %s705
        %s707 = sand.u32 %s229, 1
        %s708 = smul.addr %s707, 8
        %s709 = scalar_lea.vmem [#allocation8], %s708
        // Predicated region
        $region65: #{tpu_custom_call.1} parent=51 // pred_check
          %p710 = pneg %p239
        $region66: #{tpu_custom_call.1} parent=51 // pred_check_branch
          %712 = sbr.rel (%p710) target = $region68
        $region67: #{tpu_custom_call.1} parent=51 // pred_region
          %s714 = ssub.s32 128, 128
          %715 = vsyncadd %s706, %s714
          %s716 = smul.addr %s28, 128
          %s717 = scalar_lea.hbm %s8, %s716
          %s719 = sshll.u32 %s709, 4
          %s720 = int_to_ptr.vmem [resolvable:$true] %s719
          %722 = dma.vmem_to_hbm [thread:$0]  %s720, 128, %s717, %s706
        $region68: #{tpu_custom_call.1} parent=51 // pred_fallthru
          _
      $region52: #{tpu_custom_call.1} parent=5 // pred_fallthru
        _
      %p723 = scmp.le.s32.totalorder 2, %s23
      // Predicated region
      $region69: #{tpu_custom_call.1} parent=5 // pred_check
        %p724 = pneg %p723
      $region70: #{tpu_custom_call.1} parent=5 // pred_check_branch
        %726 = sbr.rel (%p724) target = $region72
      $region71: #{tpu_custom_call.1} parent=5 // pred_region
        %s727 = ssub.s32 %s23, 2
        // Predicated region
        $region73: #{tpu_custom_call.1} parent=71 // pred_check
          %p728 = pneg %p245
        $region74: #{tpu_custom_call.1} parent=71 // pred_check_branch
          %730 = sbr.rel (%p728) target = $region76
        $region75: #{tpu_custom_call.1} parent=71 // pred_region
          %s731 = sand.u32 %s230, 1
          %s732 = scalar_lea.sflag [#allocation4], %s731
          %s733 = sand.u32 %s230, 1
          %s734 = smul.addr %s733, 8
          %s735 = scalar_lea.vmem [#allocation8], %s734
          %736 = dma.done %s732, 128
        $region76: #{tpu_custom_call.1} parent=71 // pred_fallthru
          _
      $region72: #{tpu_custom_call.1} parent=5 // pred_fallthru
        _
    $region6: #{tpu_custom_call.1} parent=1 // loop_footer
      %s27 = sadd.s32 1, %s23
    $region7: #{tpu_custom_call.1} parent=1 // loop_footer_branch
      %22 = sbr.rel target = $region3
    $region8: #{tpu_custom_call.1} parent=1 // loop_exit
      _
    %737 = vsyncpa [#allocation3], 1
    %s738 = scalar_lea.sflag [#allocation3], 1
    %739 = vsyncpa %s738, 1
    %740 = vsyncpa [#allocation6], 1
    %s741 = scalar_lea.sflag [#allocation6], 1
    %742 = vsyncpa %s741, 1
    %743 = vsyncpa [#allocation4], 1
    %s744 = scalar_lea.sflag [#allocation4], 1
    %745 = vsyncpa %s744, 1

</llo_original>
